<compile_context>
chip_gen: v7x
topology: tpu7x:2x2x1
jax: 0.10.0
libtpu: 0.0.40
codegen_flags: <defaults>
</compile_context>

<pallas_src>
import jax
import jax.numpy as jnp
from jax import lax
from jax.experimental import pallas as pl
from jax.experimental.pallas import tpu as pltpu

_VMEM_LIMIT = 32 * 1024 * 1024   # explicit scoped-VMEM budget (safe on v5e/v6e/v7x)


def _round_up(a, b):
    return (a + b - 1) // b * b


# ---------------------------------------------------------------------------
# Pallas kernel 1: tiled matmul with lane-dense (128-padded) output columns.
# Used for ConvTranspose2d / ConvTranspose3d / 1x1 Conv2d as [M, K] x [K, N].
# ---------------------------------------------------------------------------
def _mm_kernel(a_ref, b_ref, o_ref):
    o_ref[...] = jnp.dot(a_ref[...], b_ref[...],
                         preferred_element_type=jnp.float32)


def _pick_tn(np_):
    """Largest 128-multiple tile <= 512 dividing the padded N extent."""
    for tn in (512, 384, 256, 128):
        if np_ % tn == 0:
            return tn
    return np_


def pallas_matmul(A, B):
    """A: [M, K], B: [K, N] -> [M, N] float32."""
    A = A.astype(jnp.float32)
    B = B.astype(jnp.float32)
    M, K = A.shape
    K2, N = B.shape
    assert K == K2
    TM = min(512, _round_up(M, 8))        # big M tiles -> amortized step cost
    Mp = _round_up(M, TM)
    Np = _round_up(N, 128)                # lane-dense, unmasked output stores
    TN = _pick_tn(Np)                     # bound VMEM for large channel counts
    if Mp != M:
        A = jnp.pad(A, ((0, Mp - M), (0, 0)))
    if Np != N:
        B = jnp.pad(B, ((0, 0), (0, Np - N)))
    out = pl.pallas_call(
        _mm_kernel,
        out_shape=jax.ShapeDtypeStruct((Mp, Np), jnp.float32),
        grid_spec=pltpu.PrefetchScalarGridSpec(
            num_scalar_prefetch=0,
            grid=(Mp // TM, Np // TN),
            in_specs=[pl.BlockSpec((TM, K), lambda i, j: (i, 0)),
                      pl.BlockSpec((K, TN), lambda i, j: (0, j))],
            out_specs=pl.BlockSpec((TM, TN), lambda i, j: (i, j)),
        ),
        compiler_params=pltpu.CompilerParams(
            dimension_semantics=("parallel", "parallel"),
            vmem_limit_bytes=_VMEM_LIMIT),
    )(A, B)
    return out[:M, :N]


# ---------------------------------------------------------------------------
# Pallas kernel 2: fused  swish( IN( IN(v_conv) * broadcast(w) ) )
#
# Layout: v_conv is pre-arranged as [B*C, P*S2] (projection axis P is the
# slowest spatial axis in the flattening, S2 = product of the two remaining
# spatial dims).  w is [B*C, S2] and is replicated along P *inside* the kernel
# (no HBM-materialized `w.repeat(...)`).  Both InstanceNorms reduce over the
# full spatial extent per row, i.e. per (batch, channel), like InstanceNorm3d.
# ---------------------------------------------------------------------------
def _fused_v_kernel(vt_ref, w_ref, o_ref):
    vt = vt_ref[...]                                  # (TBC, P*S2) lane-dense
    w = w_ref[...]                                    # (TBC, S2)
    reps = vt.shape[1] // w.shape[1]                  # static
    wf = jnp.concatenate([w] * reps, axis=1)          # broadcast along P

    c1 = vt - jnp.mean(vt, axis=1, keepdims=True)     # InstanceNorm3d (conv1x1[1])
    vn = c1 * lax.rsqrt(jnp.mean(c1 * c1, axis=1, keepdims=True) + 1e-5)
    vw = vn * wf                                      # v * w
    c2 = vw - jnp.mean(vw, axis=1, keepdims=True)     # self.bn (InstanceNorm3d)
    vb = c2 * lax.rsqrt(jnp.mean(c2 * c2, axis=1, keepdims=True) + 1e-5)
    o_ref[...] = vb * jax.nn.sigmoid(vb)              # Swish


def _pick_row_tile(bc, row_bytes, budget_bytes=2 << 20):
    """Largest sublane-aligned (multiple-of-8) divisor of `bc` whose block fits
    `budget_bytes` while keeping >= 2 grid steps (work for both v7x TensorCores
    / megacore).  Falls back to one full block (valid: equals full dim)."""
    cap = max(1, budget_bytes // max(row_bytes, 1))
    best = None
    for d in range(8, bc + 1, 8):
        if bc % d == 0 and d <= cap and (bc // d) >= 2:
            best = d
    return best if best is not None else bc


def fused_v(vt_flat, w2):
    """vt_flat: [B*C, P*S2], w2: [B*C, S2] -> swish(IN(IN(vt) * repeat(w)))."""
    bc, s = vt_flat.shape
    _, s2 = w2.shape
    # TODO(synk): for very large volumes (row > ~MBs, e.g. 128^3 spatial) this
    # full-spatial block should become a two-pass (stats + apply) S-tiled grid.
    tbc = _pick_row_tile(bc, row_bytes=3 * (s + s2) * 4)
    return pl.pallas_call(
        _fused_v_kernel,
        out_shape=jax.ShapeDtypeStruct((bc, s), jnp.float32),
        grid_spec=pltpu.PrefetchScalarGridSpec(
            num_scalar_prefetch=0,
            grid=(bc // tbc,),
            in_specs=[pl.BlockSpec((tbc, s), lambda i: (i, 0)),
                      pl.BlockSpec((tbc, s2), lambda i: (i, 0))],
            out_specs=pl.BlockSpec((tbc, s), lambda i: (i, 0)),
        ),
        compiler_params=pltpu.CompilerParams(
            dimension_semantics=("parallel",),
            vmem_limit_bytes=_VMEM_LIMIT),
    )(vt_flat.astype(jnp.float32), w2.astype(jnp.float32))


# ---------------------------------------------------------------------------
# JAX glue (small norms & layout helpers, channel-last).
# ---------------------------------------------------------------------------
def instance_norm_cl(x, eps=1e-5):
    """InstanceNorm over spatial for channel-last [B, s1, s2, C]."""
    m = jnp.mean(x, axis=(1, 2), keepdims=True)
    v = jnp.mean(jnp.square(x - m), axis=(1, 2), keepdims=True)
    return (x - m) * lax.rsqrt(v + eps)


def group_norm_cl(x, groups, eps=1e-5):
    """GroupNorm (identity affine) for channel-last [B, s1, s2, C]."""
    B, s1, s2, C = x.shape
    xr = x.reshape(B, s1, s2, groups, C // groups)
    m = jnp.mean(xr, axis=(1, 2, 4), keepdims=True)
    v = jnp.mean(jnp.square(xr - m), axis=(1, 2, 4), keepdims=True)
    return ((xr - m) * lax.rsqrt(v + eps)).reshape(x.shape)


def layer_norm(x, eps=1e-5):
    m = jnp.mean(x, axis=-1, keepdims=True)
    v = jnp.mean(jnp.square(x - m), axis=-1, keepdims=True)
    return (x - m) * lax.rsqrt(v + eps)


def conv_transpose2d_2x2_cl(k_cl, W):
    """ConvTranspose2d(kernel=2, stride=2, bias=False), channel-last.
    k_cl: [B, s1, s2, Cin], W: [Cin, Cout, 2, 2] -> [B, 2s1, 2s2, Cout]."""
    B, s1, s2, Cin = k_cl.shape
    Cout = W.shape[1]
    Wm = W.transpose(0, 2, 3, 1).reshape(Cin, 4 * Cout)      # [Cin,(a,b,Cout)]
    o = pallas_matmul(k_cl.reshape(B * s1 * s2, Cin), Wm)
    o = o.reshape(B, s1, s2, 2, 2, Cout).transpose(0, 1, 3, 2, 4, 5)
    return o.reshape(B, 2 * s1, 2 * s2, Cout)


def conv1x1_cl(x_cl, Wm, bias=None):
    """1x1 Conv2d as matmul, channel-last. x_cl: [B,s1,s2,Cin], Wm: [Cin,Cout]."""
    B, s1, s2, Cin = x_cl.shape
    o = pallas_matmul(x_cl.reshape(B * s1 * s2, Cin), Wm)
    if bias is not None:
        o = o + bias[None, :]
    return o.reshape(B, s1, s2, -1)


# project_dim -> permutation of [B, H, W, D, C, aH, aW, aD] giving
# [B, C, P-axis pair, (other1 pair), (other2 pair)], others in original order
# (this matches the spatial flattening of `w`).
_PROJ_PERM = {2: (0, 4, 1, 5, 2, 6, 3, 7),     # P = 2H, (o1, o2) = (2W, 2D)
              3: (0, 4, 2, 6, 1, 5, 3, 7),     # P = 2W, (o1, o2) = (2H, 2D)
              4: (0, 4, 3, 7, 1, 5, 2, 6)}     # P = 2D, (o1, o2) = (2H, 2W)
# inverse permutation of [B, C, P, o1, o2] back to NCDHW
_INV_PERM = {2: (0, 1, 2, 3, 4), 3: (0, 1, 3, 2, 4), 4: (0, 1, 3, 4, 2)}


def conv_transpose3d_2x2x2_proj(x_cl, W, project_dim):
    """ConvTranspose3d(kernel=2, stride=2, bias=False) emitting the result in
    projection-first layout [B*C, P, o1*o2].
    x_cl: [B, H, Wd, D, Cin] channel-last, W: [Cin, Cout, 2, 2, 2]."""
    B, H, Wd, D, Cin = x_cl.shape
    Cout = W.shape[1]
    Wm = W.reshape(Cin, Cout * 8)                            # [(Cin),(co,a,b,c)]
    o = pallas_matmul(x_cl.reshape(B * H * Wd * D, Cin), Wm)
    o = o.reshape(B, H, Wd, D, Cout, 2, 2, 2).transpose(_PROJ_PERM[project_dim])
    B_, C_, p0, _, q0, _, r0, _ = o.shape
    return o.reshape(B_ * C_, 2 * p0, 4 * q0 * r0)           # [BC, P, S2]


# ---------------------------------------------------------------------------
# InnerTransBlock forward.
# ---------------------------------------------------------------------------
def inner_trans_block(x, y, params, project_dim):
    """x: [B, 2C, H, W, D] (decoder, low-res), y: [B, C, 2H, 2W, 2D] (encoder).
    project_dim in {2, 3, 4} (PyTorch dim index). Returns [B, C, 2H, 2W, 2D]."""
    B, C2, H, Wd, D = x.shape
    C = C2 // 2
    ax = project_dim - 1              # projection axis in channel-last layout

    # channel-last x is reused for both the k-projection and the ConvT3d matmul
    x_cl = x.transpose(0, 2, 3, 4, 1)                        # [B, H, W, D, 2C]

    # k / q projections: max + mean over the projection axis
    k = jnp.max(x_cl, axis=ax) + jnp.mean(x_cl, axis=ax)     # [B, s1, s2, 2C]
    qn = jnp.max(y, axis=project_dim) + jnp.mean(y, axis=project_dim)
    q = qn.transpose(0, 2, 3, 1)                             # [B, 2s1, 2s2, C]

    # key_embed: ConvTranspose2d(2C->C, 2, 2) + InstanceNorm2d + ReLU
    k = conv_transpose2d_2x2_cl(k, params['key_w'])
    k = jax.nn.relu(instance_norm_cl(k))

    # embed: 1x1 conv -> IN -> ReLU -> 1x1 conv -> GroupNorm (identity affine)
    qk = jnp.concatenate([q, k], axis=-1)                    # [B, 2s1, 2s2, 2C]
    w = conv1x1_cl(qk, params['embed_w1'])
    w = jax.nn.relu(instance_norm_cl(w))
    w = conv1x1_cl(w, params['embed_w2'], params['embed_b2'])
    w = group_norm_cl(w, C // 8)                             # [B, 2s1, 2s2, C]
    w2 = w.transpose(0, 3, 1, 2).reshape(B * C, -1)          # [B*C, S2]

    # conv1x1: ConvTranspose3d(2C->C, 2, 2) in projection-first layout
    vt_p = conv_transpose3d_2x2x2_proj(x_cl, params['conv1x1_w'], project_dim)
    bc, P, S2 = vt_p.shape

    # Fused Pallas kernel: swish( IN( IN(vt) * w ) ); w broadcast along the
    # projection axis inside the kernel (no materialized w.repeat()).
    # NOTE: broadcast == PyTorch repeat only for cubic volumes (H == W == D).
    v_flat = fused_v(vt_p.reshape(bc, P * S2), w2)

    # bring v back to NCDHW once for the SE combine
    o1d, o2d = {2: (2 * Wd, 2 * D), 3: (2 * H, 2 * D), 4: (2 * H, 2 * Wd)}[project_dim]
    v = v_flat.reshape(B, C, P, o1d, o2d).transpose(_INV_PERM[project_dim])

    # split-attention (SE) over radix=2 branches {y, v}; tiny matmuls -> jnp.dot
    y_gap = jnp.mean(y, axis=(2, 3, 4)) + jnp.mean(v, axis=(2, 3, 4))   # [B, C]
    a = jnp.dot(y_gap, params['se_w1']) + params['se_b1'][None, :]
    a = jax.nn.relu(layer_norm(a))
    a = jnp.dot(a, params['se_w2']) + params['se_b2'][None, :]          # [B, 2C]
    a = jax.nn.softmax(a.reshape(B, C, 2), axis=2)
    out = (y * a[:, :, 0, None, None, None]
           + v * a[:, :, 1, None, None, None])
    return out


# ---------------------------------------------------------------------------
# Deterministic synthetic parameters (shapes as in the PyTorch module).
# ---------------------------------------------------------------------------
def make_params(key, C):
    attn_chs = max(C * 2 // 4, 32)
    ks = jax.random.split(key, 9)
    n = lambda k, s: 0.1 * jax.random.normal(k, s, jnp.float32)
    return dict(
        key_w=n(ks[0], (2 * C, C, 2, 2)),            # ConvTranspose2d weight
        embed_w1=n(ks[1], (2 * C, C // 2)),          # Conv2d 1x1 (no bias)
        embed_w2=n(ks[2], (C // 2, C)),              # Conv2d 1x1
        embed_b2=n(ks[3], (C,)),
        conv1x1_w=n(ks[4], (2 * C, C, 2, 2, 2)),     # ConvTranspose3d weight
        se_w1=n(ks[5], (C, attn_chs)),               # Conv3d 1x1x1
        se_b1=n(ks[6], (attn_chs,)),
        se_w2=n(ks[7], (attn_chs, 2 * C)),           # Conv3d 1x1x1
        se_b2=n(ks[8], (2 * C,)),
    )


if __name__ == "__main__":
    # InnerTransBlock(dim=C): x has 2C channels, y has C channels at doubled
    # (cubic) resolution — cubic so that w.repeat == broadcast holds.
    B, C, H = 2, 16, 4
    key = jax.random.PRNGKey(0)
    kx, ky, kp, k1, k2, k3, k4 = jax.random.split(key, 7)
    x = jax.random.normal(kx, (B, 2 * C, H, H, H), jnp.float32)
    y = jax.random.normal(ky, (B, C, 2 * H, 2 * H, 2 * H), jnp.float32)
    params = make_params(kp, C)

    # --- light self-checks of the two Pallas kernels vs plain XLA -----------
    a_t = jax.random.normal(k1, (100, 24), jnp.float32)
    b_t = jax.random.normal(k2, (24, 20), jnp.float32)
    assert jnp.allclose(pallas_matmul(a_t, b_t), a_t @ b_t, atol=1e-3, rtol=1e-3)

    vt_t = jax.random.normal(k3, (B * C, 8 * H * (2 * H) * (2 * H)), jnp.float32)
    w_t = jax.random.normal(k4, (B * C, (2 * H) * (2 * H)), jnp.float32)

    def _fused_ref(vtf, w2_):
        wf = jnp.tile(w2_, (1, vtf.shape[1] // w2_.shape[1]))
        def inorm(z):
            m = jnp.mean(z, axis=1, keepdims=True)
            v = jnp.mean(jnp.square(z - m), axis=1, keepdims=True)
            return (z - m) / jnp.sqrt(v + 1e-5)
        vb = inorm(inorm(vtf) * wf)
        return vb * jax.nn.sigmoid(vb)

    assert jnp.allclose(fused_v(vt_t, w_t), _fused_ref(vt_t, w_t),
                        atol=2e-3, rtol=2e-3)

    # --- full InnerTransBlock forward (all three projection axes) -----------
    fwd = jax.jit(inner_trans_block, static_argnames="project_dim")
    ok = True
    for pd in (2, 3, 4):
        out = jax.block_until_ready(fwd(x, y, params, project_dim=pd))
        ok &= out.shape == (B, C, 2 * H, 2 * H, 2 * H)
        ok &= bool(jnp.all(jnp.isfinite(out)))
    assert ok
    print("KERNEL_OK")
</pallas_src>

<mosaic_0001>
module attributes {stable_mosaic.version = 11 : i64} {
  func.func @_mm_kernel(%arg0: i32, %arg1: i32, %arg2: memref<104x24xf32, #tpu.memory_space<vmem>>, %arg3: memref<24x128xf32, #tpu.memory_space<vmem>>, %arg4: memref<104x128xf32, #tpu.memory_space<vmem>>) attributes {dimension_semantics = [#tpu.dimension_semantics<parallel>, #tpu.dimension_semantics<parallel>], iteration_bounds = array<i64: 1, 1>, scalar_prefetch = 0 : i64, scratch_operands = 0 : i64, tpu.core_type = #tpu.core_type<tc>, window_params = [{transform_indices = @transform_0, window_bounds = array<i64: 104, 24>}, {transform_indices = @transform_1, window_bounds = array<i64: 24, 128>}, {transform_indices = @transform_2, window_bounds = array<i64: 104, 128>}]} {
    %c0 = arith.constant 0 : index
    %c0_0 = arith.constant 0 : index
    %0 = vector.load %arg2[%c0, %c0_0] : memref<104x24xf32, #tpu.memory_space<vmem>>, vector<104x24xf32>
    %c0_1 = arith.constant 0 : index
    %c0_2 = arith.constant 0 : index
    %1 = vector.load %arg3[%c0_1, %c0_2] : memref<24x128xf32, #tpu.memory_space<vmem>>, vector<24x128xf32>
    %cst = arith.constant dense<0.000000e+00> : vector<104x128xf32>
    %2 = tpu.matmul %0, %1, %cst {dimension_numbers = #tpu.dot_dimension_numbers<[1], [0], [0], [1], [0, 0, 1, 1], [], []>} : vector<104x24xf32>, vector<24x128xf32>, vector<104x128xf32> -> vector<104x128xf32>
    %c0_3 = arith.constant 0 : index
    %c0_4 = arith.constant 0 : index
    %3 = vector.load %arg4[%c0_3, %c0_4] : memref<104x128xf32, #tpu.memory_space<vmem>>, vector<104x128xf32>
    tpu.vector_store %arg4[%c0_3, %c0_4], %2 {strides = array<i32>} : memref<104x128xf32, #tpu.memory_space<vmem>>, vector<104x128xf32>,
    return
  }
  func.func @transform_0(%arg0: i32, %arg1: i32) -> (i32, i32) {
    %c0_i32 = arith.constant 0 : i32
    %c0_i32_0 = arith.constant 0 : i32
    return %arg0, %c0_i32 : i32, i32
  }
  func.func @transform_1(%arg0: i32, %arg1: i32) -> (i32, i32) {
    %c0_i32 = arith.constant 0 : i32
    %c0_i32_0 = arith.constant 0 : i32
    return %c0_i32, %arg1 : i32, i32
  }
  func.func @transform_2(%arg0: i32, %arg1: i32) -> (i32, i32) {
    %c0_i32 = arith.constant 0 : i32
    return %arg0, %arg1 : i32, i32
  }
}

</mosaic_0001>

<llo_original>
// kernel: tpu_custom_call.1
$region0: #{tpu_custom_call.1}
  #allocation0 [shape = 'u32[]', space=smem, size = 0x4, offset = 0x4, fixed_abs, tag = 'smem constant byte address 0x4 - core index']
  #allocation1 [shape = 'u32[144,128]{1,0:T(1,128)}', space=vmem, size = 0x12000, scoped, tag = 'internal scratch']
  %s0 = inlined_call_operand.vmem [shape: f32[104,24], index: 0, kind: input, shape index: {}]
  %s1 = inlined_call_operand.vmem [shape: f32[24,128], index: 1, kind: input, shape index: {}]
  %s2 = inlined_call_operand.hbm [shape: f32[104,128], index: 2, kind: output, shape index: {}]
  %s3 = sld [smem:[#allocation0]]
  $region18: #{tpu_custom_call.1} parent=0
    _
  %s5 = ssub.s32 1, %s3
  %s6 = scalar_select 0, %s5, %s3
  $region1: #{tpu_custom_call.1} parent=0
    #allocation2 [shape = 'u8[53248]{0}', space=vmem, size = 0xd000, scoped, tag = 'output window, operand 0, single buffered']
    #allocation3 [shape = 's32[1]{0}', space=sflag, size = 0x4, scoped, tag = 'scoped memory for tpu_custom_call.1']
    %7 = vsyncpa [#allocation3], 0
    // Predicated region
    $region2: #{tpu_custom_call.1} parent=1 // pred_check
      _
    $region3: #{tpu_custom_call.1} parent=1 // pred_check_branch
      %9 = sbr.rel (0) target = $region5
    $region4: #{tpu_custom_call.1} parent=1 // pred_region
      _
    $region5: #{tpu_custom_call.1} parent=1 // pred_fallthru
      _
    // Predicated region
    $region6: #{tpu_custom_call.1} parent=1 // pred_check
      _
    $region7: #{tpu_custom_call.1} parent=1 // pred_check_branch
      %11 = sbr.rel (0) target = $region9
    $region8: #{tpu_custom_call.1} parent=1 // pred_region
      _
    $region9: #{tpu_custom_call.1} parent=1 // pred_fallthru
      _
    %v12 = vld [vmem:[%s0] sm:$0xff]
    %v13 = vld [vmem:[%s0 + $0x8] sm:$0xff]
    %v14 = vld [vmem:[%s0 + $0x10] sm:$0xff]
    %v15 = vld [vmem:[%s0 + $0x18] sm:$0xff]
    %v16 = vld [vmem:[%s0 + $0x20] sm:$0xff]
    %v17 = vld [vmem:[%s0 + $0x28] sm:$0xff]
    %v18 = vld [vmem:[%s0 + $0x30] sm:$0xff]
    %v19 = vld [vmem:[%s0 + $0x38] sm:$0xff]
    %v20 = vld [vmem:[%s0 + $0x40] sm:$0xff]
    %v21 = vld [vmem:[%s0 + $0x48] sm:$0xff]
    %v22 = vld [vmem:[%s0 + $0x50] sm:$0xff]
    %v23 = vld [vmem:[%s0 + $0x58] sm:$0xff]
    %v24 = vld [vmem:[%s0 + $0x60] sm:$0xff]
    %v25 = vld [vmem:[%s1] sm:$0xff]
    %v26 = vld [vmem:[%s1 + $0x8] sm:$0xff]
    %v27 = vld [vmem:[%s1 + $0x10] sm:$0xff]
    %vm28 = vcmask 195584
    %v30 = vsel %vm28, %v12, 0
    %v33 = vsel %vm28, %v13, 0
    %v36 = vsel %vm28, %v14, 0
    %v39 = vsel %vm28, %v15, 0
    %v42 = vsel %vm28, %v16, 0
    %v45 = vsel %vm28, %v17, 0
    %v48 = vsel %vm28, %v18, 0
    %v51 = vsel %vm28, %v19, 0
    %v54 = vsel %vm28, %v20, 0
    %v57 = vsel %vm28, %v21, 0
    %v60 = vsel %vm28, %v22, 0
    %v63 = vsel %vm28, %v23, 0
    %v66 = vsel %vm28, %v24, 0
    %68 = vmatprep.subr.mxu0 0.0
    %69 = vmatpush1.msra.mxu0 %v25
    %70 = vmatprep.subr.mxu0 0.0
    %71 = vmatpush1.msra.mxu0 %v26
    %72 = vmatprep.subr.mxu0 0.0
    %73 = vmatpush1.msra.mxu0 %v27
    %74 = vmatprep.subr.mxu0 0.0
    %75 = vmatpush1.msra.mxu0 0.0
    %76 = vmatprep.subr.mxu0 0.0
    %77 = vmatpush1.msra.mxu0 0.0
    %78 = vmatprep.subr.mxu0 0.0
    %79 = vmatpush1.msra.mxu0 0.0
    %80 = vmatprep.subr.mxu0 0.0
    %81 = vmatpush1.msra.mxu0 0.0
    %82 = vmatprep.subr.mxu0 0.0
    %83 = vmatpush1.msra.mxu0 0.0
    %84 = vmatprep.subr.mxu0 0.0
    %85 = vmatpush1.msra.mxu0 0.0
    %86 = vmatprep.subr.mxu0 0.0
    %87 = vmatpush1.msra.mxu0 0.0
    %88 = vmatprep.subr.mxu0 0.0
    %89 = vmatpush1.msra.mxu0 0.0
    %90 = vmatprep.subr.mxu0 0.0
    %91 = vmatpush1.msra.mxu0 0.0
    %92 = vmatprep.subr.mxu0 0.0
    %93 = vmatpush1.msra.mxu0 0.0
    %94 = vmatprep.subr.mxu0 0.0
    %95 = vmatpush1.msra.mxu0 0.0
    %96 = vmatprep.subr.mxu0 0.0
    %97 = vmatpush1.msra.mxu0 0.0
    %98 = vmatprep.subr.mxu0 0.0
    %99 = vmatpush1.msra.mxu0 0.0
    %100 = vmatprep.subr.mxu0 0.0
    %101 = vmatpush1.msra.mxu0 0.0
    %102 = vmatprep.subr.mxu0 0.0
    %103 = vmatpush1.msra.mxu0 0.0
    %104 = vmatprep.subr.mxu0 0.0
    %105 = vmatpush1.msra.mxu0 0.0
    %106 = vmatprep.subr.mxu0 0.0
    %107 = vmatpush1.msra.mxu0 0.0
    %108 = vmatprep.subr.mxu0 0.0
    %109 = vmatpush1.msra.mxu0 0.0
    %110 = vmatprep.subr.mxu0 0.0
    %111 = vmatpush1.msra.mxu0 0.0
    %112 = vmatprep.subr.mxu0 0.0
    %113 = vmatpush1.msra.mxu0 0.0
    %114 = vmatprep.subr.mxu0 0.0
    %115 = vmatpush1.msra.mxu0 0.0
    %116 = vmatprep.subr.mxu0 0.0
    %117 = vmatpush1.msra.mxu0 0.0
    %118 = vmatprep.subr.mxu0 0.0
    %119 = vmatpush1.msra.mxu0 0.0
    %120 = vmatprep.subr.mxu0 0.0
    %121 = vmatpush1.msra.mxu0 0.0
    %122 = vmatprep.subr.mxu0 0.0
    %123 = vmatpush1.msra.mxu0 0.0
    %124 = vmatprep.subr.mxu0 0.0
    %125 = vmatpush1.msra.mxu0 0.0
    %126 = vmatprep.subr.mxu0 0.0
    %127 = vmatpush1.msra.mxu0 0.0
    %128 = vmatprep.subr.mxu0 0.0
    %129 = vmatpush1.msra.mxu0 0.0
    %130 = vmatprep.subr.mxu0 0.0
    %131 = vmatpush1.msra.mxu0 0.0
    %132 = vmatprep.mubr.f32.mxu0 0.0
    %133 = vmatmul.mubr.f32.gmra.mrb[0].mxu0 %v30
    %v134 = vpop.f32.mrb[0].mxu0
    %v135 = vadd.f32 0.0, %v134
    %v136 = vpop.f32.mrb[0].mxu0
    %137 = vmatprep.mubr.f32.mxu0 0.0
    %138 = vmatmul.mubr.f32.gmra.mrb[0].mxu0 %v33
    %v139 = vpop.f32.mrb[0].mxu0
    %v140 = vadd.f32 0.0, %v139
    %v141 = vpop.f32.mrb[0].mxu0
    %142 = vmatprep.mubr.f32.mxu0 0.0
    %143 = vmatmul.mubr.f32.gmra.mrb[0].mxu0 %v36
    %v144 = vpop.f32.mrb[0].mxu0
    %v145 = vadd.f32 0.0, %v144
    %v146 = vpop.f32.mrb[0].mxu0
    %147 = vmatprep.mubr.f32.mxu0 0.0
    %148 = vmatmul.mubr.f32.gmra.mrb[0].mxu0 %v39
    %v149 = vpop.f32.mrb[0].mxu0
    %v150 = vadd.f32 0.0, %v149
    %v151 = vpop.f32.mrb[0].mxu0
    %152 = vmatprep.mubr.f32.mxu0 0.0
    %153 = vmatmul.mubr.f32.gmra.mrb[0].mxu0 %v42
    %v154 = vpop.f32.mrb[0].mxu0
    %v155 = vadd.f32 0.0, %v154
    %v156 = vpop.f32.mrb[0].mxu0
    %157 = vmatprep.mubr.f32.mxu0 0.0
    %158 = vmatmul.mubr.f32.gmra.mrb[0].mxu0 %v45
    %v159 = vpop.f32.mrb[0].mxu0
    %v160 = vadd.f32 0.0, %v159
    %v161 = vpop.f32.mrb[0].mxu0
    %162 = vmatprep.mubr.f32.mxu0 0.0
    %163 = vmatmul.mubr.f32.gmra.mrb[0].mxu0 %v48
    %v164 = vpop.f32.mrb[0].mxu0
    %v165 = vadd.f32 0.0, %v164
    %v166 = vpop.f32.mrb[0].mxu0
    %167 = vmatprep.mubr.f32.mxu0 0.0
    %168 = vmatmul.mubr.f32.gmra.mrb[0].mxu0 %v51
    %v169 = vpop.f32.mrb[0].mxu0
    %v170 = vadd.f32 0.0, %v169
    %v171 = vpop.f32.mrb[0].mxu0
    %172 = vmatprep.mubr.f32.mxu0 0.0
    %173 = vmatmul.mubr.f32.gmra.mrb[0].mxu0 %v54
    %v174 = vpop.f32.mrb[0].mxu0
    %v175 = vadd.f32 0.0, %v174
    %v176 = vpop.f32.mrb[0].mxu0
    %177 = vmatprep.mubr.f32.mxu0 0.0
    %178 = vmatmul.mubr.f32.gmra.mrb[0].mxu0 %v57
    %v179 = vpop.f32.mrb[0].mxu0
    %v180 = vadd.f32 0.0, %v179
    %v181 = vpop.f32.mrb[0].mxu0
    %182 = vmatprep.mubr.f32.mxu0 0.0
    %183 = vmatmul.mubr.f32.gmra.mrb[0].mxu0 %v60
    %v184 = vpop.f32.mrb[0].mxu0
    %v185 = vadd.f32 0.0, %v184
    %v186 = vpop.f32.mrb[0].mxu0
    %187 = vmatprep.mubr.f32.mxu0 0.0
    %188 = vmatmul.mubr.f32.gmra.mrb[0].mxu0 %v63
    %v189 = vpop.f32.mrb[0].mxu0
    %v190 = vadd.f32 0.0, %v189
    %v191 = vpop.f32.mrb[0].mxu0
    %192 = vmatprep.mubr.f32.mxu0 0.0
    %193 = vmatmul.mubr.f32.gmra.mrb[0].mxu0 %v66
    %v194 = vpop.f32.mrb[0].mxu0
    %v195 = vadd.f32 0.0, %v194
    %v196 = vpop.f32.mrb[0].mxu0
    %197 = vdwg.mxu0
    %198 = vst [vmem:[#allocation2] sm:$0xff] %v135
    %199 = vst [vmem:[#allocation2 + $0x8] sm:$0xff] %v140
    %200 = vst [vmem:[#allocation2 + $0x10] sm:$0xff] %v145
    %201 = vst [vmem:[#allocation2 + $0x18] sm:$0xff] %v150
    %202 = vst [vmem:[#allocation2 + $0x20] sm:$0xff] %v155
    %203 = vst [vmem:[#allocation2 + $0x28] sm:$0xff] %v160
    %204 = vst [vmem:[#allocation2 + $0x30] sm:$0xff] %v165
    %205 = vst [vmem:[#allocation2 + $0x38] sm:$0xff] %v170
    %206 = vst [vmem:[#allocation2 + $0x40] sm:$0xff] %v175
    %207 = vst [vmem:[#allocation2 + $0x48] sm:$0xff] %v180
    %208 = vst [vmem:[#allocation2 + $0x50] sm:$0xff] %v185
    %209 = vst [vmem:[#allocation2 + $0x58] sm:$0xff] %v190
    %210 = vst [vmem:[#allocation2 + $0x60] sm:$0xff] %v195
    // Predicated region
    $region10: #{tpu_custom_call.1} parent=1 // pred_check
      _
    $region11: #{tpu_custom_call.1} parent=1 // pred_check_branch
      %212 = sbr.rel (0) target = $region13
    $region12: #{tpu_custom_call.1} parent=1 // pred_region
      %s214 = ssub.s32 1664, 1664
      %215 = vsyncadd [#allocation3], %s214
      %s216 = sshll.u32 [#allocation2], 4
      %s217 = int_to_ptr.vmem [resolvable:$true] %s216
      %222 = dma.vmem_to_hbm [thread:$0]  %s217, 1664, %s2, [#allocation3], 128, 128, 8
    $region13: #{tpu_custom_call.1} parent=1 // pred_fallthru
      _
    // Predicated region
    $region14: #{tpu_custom_call.1} parent=1 // pred_check
      _
    $region15: #{tpu_custom_call.1} parent=1 // pred_check_branch
      %224 = sbr.rel (0) target = $region17
    $region16: #{tpu_custom_call.1} parent=1 // pred_region
      %225 = dma.done [#allocation3], 1664
    $region17: #{tpu_custom_call.1} parent=1 // pred_fallthru
      _
    %226 = vsyncpa [#allocation3], 1

</llo_original>
